<compile_context>
chip_gen: v6e
topology: v6e:2x2x1
jax: 0.10.0
libtpu: 0.0.40
codegen_flags: <defaults>
</compile_context>

<pallas_src>
import functools
from math import log, lcm, pi

import numpy as np
import jax
import jax.numpy as jnp
from jax.experimental import pallas as pl
from jax.experimental.pallas import tpu as pltpu


def _rotl32(v, r):
    return (v << jnp.uint32(r)) | (v >> jnp.uint32(32 - r))


def _pe_kernel(seed_ref, div_ref, base_ref, x_ref, o_ref, *,
               d_model, tile_f, dropout_p, train):
    """One grid step processes a (B, tile_f) lane-dense tile of the flattened x.

    div_ref/base_ref are (1, tile_f) trace-time constants:
      angle[f] = pos_base * div_c[f] + base_c[f]
      pe[f]    = sin(angle[f])            (cos encoded via +pi/2 phase in base_c)
    """
    i = pl.program_id(0)

    # First sequence position covered by this tile (tile_f is a multiple of D).
    pos_base = (i * (tile_f // d_model)).astype(jnp.float32)

    # PE computed once at (1, tile_f); broadcast over batch in the add below.
    angle = pos_base * div_ref[...] + base_ref[...]
    pe = jnp.sin(angle)                                   # (1, tile_f), f32

    x = x_ref[...]
    if x.dtype == jnp.bfloat16:
        # keep the batch-sized tensor math in bf16 (native VPU on v6e/v7x)
        y = x + pe.astype(jnp.bfloat16)
    else:
        y = x.astype(jnp.float32) + pe

    if train and dropout_p > 0.0:
        if dropout_p >= 1.0:
            y = jnp.zeros_like(y)
        else:
            b, tf = x_ref.shape
            # Counter-based hash: (flat column index, batch row) mixed with seed
            # using only add/xor/rotate (portable; no pltpu.prng_* needed).
            col = (i * tile_f
                   + jax.lax.broadcasted_iota(jnp.int32, (b, tf), 1)).astype(jnp.uint32)
            row = jax.lax.broadcasted_iota(jnp.int32, (b, tf), 0).astype(jnp.uint32)
            seed = seed_ref[0].astype(jnp.uint32)
            k0 = seed
            k1 = seed ^ jnp.uint32(0x1BD11BDA)
            v0 = col + k0
            v1 = row + k1
            for r in (13, 15, 26, 6, 17, 29, 16, 24):
                v0 = v0 + v1
                v1 = _rotl32(v1, r) ^ v0
            bits = v0 + k1
            # uniform in [0, 1) from the top 24 bits
            u = (bits >> jnp.uint32(8)).astype(jnp.int32).astype(jnp.float32) \
                * jnp.float32(1.0 / (1 << 24))
            keep = u >= jnp.float32(dropout_p)
            scale = jnp.asarray(1.0 / (1.0 - dropout_p), dtype=y.dtype)
            y = jnp.where(keep, y * scale, jnp.zeros_like(y))
    # (eval mode: dropout is the identity)

    o_ref[...] = y.astype(o_ref.dtype)


def positional_encoding(x, *, dropout_p=0.1, train=False, seed=0,
                        max_len=5000, tile_f=None,
                        target_block_bytes=2 * 1024 * 1024):
    """x: [B, S, D] -> dropout(x + pe[:, :S, :]); dropout is identity in eval."""
    B, S, D = x.shape
    assert S <= max_len, "sequence length exceeds max_len"
    W = S * D

    # Tile unit: multiple of 128 (lane-dense stores) and of D (so every tile
    # starts at a channel-0 boundary -> pe pattern inside a tile is constant).
    unit = lcm(D, 128)
    if tile_f is None:
        itemsize = jnp.dtype(x.dtype).itemsize
        rows = max(1, target_block_bytes // (B * unit * itemsize))
        tile_f = min(unit * int(rows), ((W + unit - 1) // unit) * unit)
    assert tile_f % unit == 0, "tile_f must be a multiple of lcm(D, 128)"
    grid = (pl.cdiv(W, tile_f),)

    # Trace-time constants (numpy, f64 then cast): no exp(), no int div/mod,
    # and no sin/cos pair inside the kernel -- just one sin per lane element.
    f = np.arange(tile_f, dtype=np.float64)
    d_idx = f % D                                # channel index of each flat slot
    two_k = d_idx - (d_idx % 2)
    div = np.exp(two_k * (-log(10000.0) / D))    # div_term, per flat slot
    phase = np.where((d_idx % 2) == 1, pi / 2.0, 0.0)   # cos = sin(. + pi/2)
    f_div_D = np.floor(f / D)                    # position offset within the tile
    div_c = jnp.asarray(div, dtype=jnp.float32)[None, :]
    base_c = jnp.asarray(f_div_D * div + phase, dtype=jnp.float32)[None, :]

    x_flat = x.reshape(B, W)
    seed_arr = jnp.asarray([seed], dtype=jnp.int32)

    kernel = functools.partial(
        _pe_kernel, d_model=D, tile_f=tile_f,
        dropout_p=float(dropout_p), train=bool(train))

    out_flat = pl.pallas_call(
        kernel,
        out_shape=jax.ShapeDtypeStruct((B, W), x.dtype),
        grid_spec=pltpu.PrefetchScalarGridSpec(
            num_scalar_prefetch=1,
            grid=grid,
            in_specs=[
                pl.BlockSpec((1, tile_f), lambda i, s: (0, 0)),   # div_c
                pl.BlockSpec((1, tile_f), lambda i, s: (0, 0)),   # base_c
                pl.BlockSpec((B, tile_f), lambda i, s: (0, i)),   # x
            ],
            out_specs=pl.BlockSpec((B, tile_f), lambda i, s: (0, i)),
        ),
        compiler_params=pltpu.CompilerParams(
            dimension_semantics=("parallel",)),
    )(seed_arr, div_c, base_c, x_flat)

    return out_flat.reshape(B, S, D)


def _reference_eval(x):
    """Pure-JAX reference of the PyTorch forward in eval mode."""
    B, S, D = x.shape
    position = jnp.arange(S, dtype=jnp.float32)[:, None]                 # [S,1]
    div_term = jnp.exp(jnp.arange(0, D, 2, dtype=jnp.float32)
                       * (-log(10000.0) / D))                            # [D/2]
    pe = jnp.zeros((S, D), dtype=jnp.float32)
    pe = pe.at[:, 0::2].set(jnp.sin(position * div_term))
    pe = pe.at[:, 1::2].set(jnp.cos(position * div_term))
    return (x.astype(jnp.float32) + pe[None, :, :]).astype(x.dtype)


if __name__ == "__main__":
    key = jax.random.PRNGKey(0)

    # --- eval-mode forward (dropout identity), small shape from the module ---
    B, S, D = 2, 8, 32            # batch, seq, d_model
    x = jax.random.normal(key, (B, S, D), dtype=jnp.float32)
    out = jax.block_until_ready(positional_encoding(x, dropout_p=0.1, train=False))
    ref = _reference_eval(x)
    assert out.shape == x.shape and out.dtype == x.dtype
    assert jnp.allclose(out, ref, atol=1e-4, rtol=1e-4), "mismatch vs reference"

    # --- multi-tile path (grid > 1) with a partial last block ---
    S2 = 136
    x2 = jax.random.normal(jax.random.PRNGKey(1), (B, S2, D), dtype=jnp.float32)
    out2 = jax.block_until_ready(positional_encoding(x2, train=False, tile_f=1024))
    assert jnp.allclose(out2, _reference_eval(x2), atol=1e-4, rtol=1e-4), \
        "mismatch vs reference (tiled path)"

    # --- training-mode dropout: kept elements equal ref/(1-p), some are zeroed ---
    p = 0.1
    out_tr = jax.block_until_ready(
        positional_encoding(x, dropout_p=p, train=True, seed=123))
    assert out_tr.shape == x.shape and out_tr.dtype == x.dtype
    kept = out_tr != 0
    frac_dropped = 1.0 - float(jnp.mean(kept.astype(jnp.float32)))
    assert 0.0 < frac_dropped < 0.5, f"implausible dropout fraction {frac_dropped}"
    assert jnp.allclose(jnp.where(kept, out_tr, 0.0),
                        jnp.where(kept, ref / (1.0 - p), 0.0),
                        atol=1e-4, rtol=1e-4), "kept elements not scaled correctly"

    print("KERNEL_OK")
</pallas_src>

<mosaic_0001>
module attributes {stable_mosaic.version = 11 : i64} {
  func.func @_pe_kernel(%arg0: i32, %arg1: memref<1xi32, #tpu.memory_space<smem>>, %arg2: memref<1x256xf32, #tpu.memory_space<vmem>>, %arg3: memref<1x256xf32, #tpu.memory_space<vmem>>, %arg4: memref<2x256xf32, #tpu.memory_space<vmem>>, %arg5: memref<2x256xf32, #tpu.memory_space<vmem>>) attributes {dimension_semantics = [#tpu.dimension_semantics<parallel>], iteration_bounds = array<i64: 1>, scalar_prefetch = 1 : i64, scratch_operands = 0 : i64, tpu.core_type = #tpu.core_type<tc>, window_params = [{pipeline_mode = #tpu.pipeline_mode<synchronous>, transform_indices = @transform_0, window_bounds = array<i64: 1, 256>}, {pipeline_mode = #tpu.pipeline_mode<synchronous>, transform_indices = @transform_1, window_bounds = array<i64: 1, 256>}, {transform_indices = @transform_2, window_bounds = array<i64: 2, 256>}, {transform_indices = @transform_3, window_bounds = array<i64: 2, 256>}]} {
    %c8_i32 = arith.constant 8 : i32
    %0 = arith.muli %arg0, %c8_i32 : i32
    %1 = arith.sitofp %0 : i32 to f32
    %c0 = arith.constant 0 : index
    %c0_0 = arith.constant 0 : index
    %2 = vector.load %arg2[%c0, %c0_0] : memref<1x256xf32, #tpu.memory_space<vmem>>, vector<1x256xf32>
    %3 = vector.broadcast %1 : f32 to vector<1x256xf32>
    %4 = arith.mulf %3, %2 : vector<1x256xf32>
    %c0_1 = arith.constant 0 : index
    %c0_2 = arith.constant 0 : index
    %5 = vector.load %arg3[%c0_1, %c0_2] : memref<1x256xf32, #tpu.memory_space<vmem>>, vector<1x256xf32>
    %6 = arith.addf %4, %5 : vector<1x256xf32>
    %7 = math.sin %6 : vector<1x256xf32>
    %c0_3 = arith.constant 0 : index
    %c0_4 = arith.constant 0 : index
    %8 = vector.load %arg4[%c0_3, %c0_4] : memref<2x256xf32, #tpu.memory_space<vmem>>, vector<2x256xf32>
    %9 = vector.broadcast %7 : vector<1x256xf32> to vector<2x256xf32>
    %10 = arith.addf %8, %9 : vector<2x256xf32>
    %c0_5 = arith.constant 0 : index
    %c0_6 = arith.constant 0 : index
    %11 = vector.load %arg5[%c0_5, %c0_6] : memref<2x256xf32, #tpu.memory_space<vmem>>, vector<2x256xf32>
    tpu.vector_store %arg5[%c0_5, %c0_6], %10 {strides = array<i32>} : memref<2x256xf32, #tpu.memory_space<vmem>>, vector<2x256xf32>,
    return
  }
  func.func @transform_0(%arg0: i32, %arg1: memref<1xi32, #tpu.memory_space<smem>>) -> (i32, i32) {
    %c0_i32 = arith.constant 0 : i32
    %c0_i32_0 = arith.constant 0 : i32
    %c0_i32_1 = arith.constant 0 : i32
    return %c0_i32, %c0_i32_0 : i32, i32
  }
  func.func @transform_1(%arg0: i32, %arg1: memref<1xi32, #tpu.memory_space<smem>>) -> (i32, i32) {
    %c0_i32 = arith.constant 0 : i32
    %c0_i32_0 = arith.constant 0 : i32
    %c0_i32_1 = arith.constant 0 : i32
    return %c0_i32, %c0_i32_0 : i32, i32
  }
  func.func @transform_2(%arg0: i32, %arg1: memref<1xi32, #tpu.memory_space<smem>>) -> (i32, i32) {
    %c0_i32 = arith.constant 0 : i32
    %c0_i32_0 = arith.constant 0 : i32
    return %c0_i32, %arg0 : i32, i32
  }
  func.func @transform_3(%arg0: i32, %arg1: memref<1xi32, #tpu.memory_space<smem>>) -> (i32, i32) {
    %c0_i32 = arith.constant 0 : i32
    %c0_i32_0 = arith.constant 0 : i32
    return %c0_i32, %arg0 : i32, i32
  }
}

</mosaic_0001>

<llo_original>
// kernel: tpu_custom_call.1
$region0: #{tpu_custom_call.1}
  #allocation0 [shape = 'u32[]', space=smem, size = 0x4, offset = 0x4, fixed_abs, tag = 'smem constant byte address 0x4 - core index']
  #allocation1 [shape = 'u32[144,128]{1,0:T(1,128)}', space=vmem, size = 0x12000, scoped, tag = 'internal scratch']
  #allocation2 [shape = 's32[1]{0}', space=sflag, size = 0x4, scoped, tag = 'scoped memory for tpu_custom_call.1']
  #allocation3 [shape = 's32[1]{0:T(128)S(6)}', space=smem, size = 0x200, scoped, tag = 'prefetched SMEM operand 0']
  %s0 = inlined_call_operand.<no memory space> [shape: s32[1], index: 0, kind: input, shape index: {}]
  %s1 = inlined_call_operand.hbm [shape: f32[1,256], index: 1, kind: input, shape index: {}]
  %s2 = inlined_call_operand.hbm [shape: f32[1,256], index: 2, kind: input, shape index: {}]
  %s3 = inlined_call_operand.vmem [shape: f32[2,256], index: 3, kind: input, shape index: {}]
  %s4 = inlined_call_operand.hbm [shape: f32[2,256], index: 4, kind: output, shape index: {}]
  %s5 = sld [smem:[#allocation0]]
  $region30: #{tpu_custom_call.1} parent=0
    _
  %s7 = ssub.s32 1, %s5
  %s8 = scalar_select 0, %s7, %s5
  %9 = sst [smem:[#allocation3]] %s0
  $region1: #{tpu_custom_call.1} parent=0
    #allocation4 [shape = 'u8[1024]{0}', space=vmem, size = 0x400, scoped, tag = 'input window, operand 1, single buffered']
    #allocation5 [shape = 's32[1]{0}', space=sflag, size = 0x4, scoped, tag = 'scoped memory for tpu_custom_call.1']
    #allocation6 [shape = 's32[1]{0}', space=sflag, size = 0x4, scoped, tag = 'scoped memory for tpu_custom_call.1']
    #allocation7 [shape = 'u8[1024]{0}', space=vmem, size = 0x400, scoped, tag = 'input window, operand 2, single buffered']
    #allocation8 [shape = 's32[1]{0}', space=sflag, size = 0x4, scoped, tag = 'scoped memory for tpu_custom_call.1']
    #allocation9 [shape = 'u8[2048]{0}', space=vmem, size = 0x800, scoped, tag = 'output window, operand 0, single buffered']
    %10 = vsyncpa [#allocation5], 0
    %11 = vsyncpa [#allocation8], 0
    %12 = vsyncpa [#allocation6], 0
    // Predicated region
    $region2: #{tpu_custom_call.1} parent=1 // pred_check
      _
    $region3: #{tpu_custom_call.1} parent=1 // pred_check_branch
      %14 = sbr.rel (0) target = $region5
    $region4: #{tpu_custom_call.1} parent=1 // pred_region
      %s16 = ssub.s32 32, 32
      %17 = vsyncadd [#allocation5], %s16
      %s19 = sshll.u32 [#allocation4], 4
      %s20 = int_to_ptr.vmem [resolvable:$true] %s19
      %22 = dma.hbm_to_vmem [thread:$0]  %s1, 32, %s20, [#allocation5]
    $region5: #{tpu_custom_call.1} parent=1 // pred_fallthru
      _
    // Predicated region
    $region6: #{tpu_custom_call.1} parent=1 // pred_check
      _
    $region7: #{tpu_custom_call.1} parent=1 // pred_check_branch
      %24 = sbr.rel (0) target = $region9
    $region8: #{tpu_custom_call.1} parent=1 // pred_region
      %s26 = ssub.s32 32, 32
      %27 = vsyncadd [#allocation8], %s26
      %s29 = sshll.u32 [#allocation7], 4
      %s30 = int_to_ptr.vmem [resolvable:$true] %s29
      %32 = dma.hbm_to_vmem [thread:$0]  %s2, 32, %s30, [#allocation8]
    $region9: #{tpu_custom_call.1} parent=1 // pred_fallthru
      _
    // Predicated region
    $region10: #{tpu_custom_call.1} parent=1 // pred_check
      _
    $region11: #{tpu_custom_call.1} parent=1 // pred_check_branch
      %34 = sbr.rel (0) target = $region13
    $region12: #{tpu_custom_call.1} parent=1 // pred_region
      _
    $region13: #{tpu_custom_call.1} parent=1 // pred_fallthru
      _
    // Predicated region
    $region14: #{tpu_custom_call.1} parent=1 // pred_check
      _
    $region15: #{tpu_custom_call.1} parent=1 // pred_check_branch
      %36 = sbr.rel (0) target = $region17
    $region16: #{tpu_custom_call.1} parent=1 // pred_region
      %37 = dma.done [#allocation5], 32
    $region17: #{tpu_custom_call.1} parent=1 // pred_fallthru
      _
    // Predicated region
    $region18: #{tpu_custom_call.1} parent=1 // pred_check
      _
    $region19: #{tpu_custom_call.1} parent=1 // pred_check_branch
      %39 = sbr.rel (0) target = $region21
    $region20: #{tpu_custom_call.1} parent=1 // pred_region
      %40 = dma.done [#allocation8], 32
    $region21: #{tpu_custom_call.1} parent=1 // pred_fallthru
      _
    %s41 = smul.u32 0, 8
    %s42 = scvt.s32.f32 %s41
    %v43 = vld [vmem:[#allocation4] sm:$0x3]
    %v44 = vstv %s42
    %v45 = vmul.f32 %v44, %v43
    %v46 = vld [vmem:[#allocation7] sm:$0x3]
    %v47 = vadd.f32 %v45, %v46
    %v48 = vand.u32 2147483647, %v47
    %vm49 = vcmp.le.f32.partialorder %v48, 0.7853982
    %vm50 = vcmp.lt.s32.totalorder %v47, 0
    %v51 = vand.u32 %v47, 2139095040
    %v52 = vshrl.u32 %v51, 23
    %v53 = vsub.s32 %v52, 127
    %v54 = vand.u32 2147483647, %v47
    %v55 = vand.u32 %v54, 8388607
    %v56 = vor.u32 %v55, 8388608
    %v57 = vsub.s32 0, %v56
    %v58 = vadd.s32 %v53, 1
    %vm59 = vcmp.gt.s32.totalorder %v58, 0
    %v60 = vsel %vm59, %v58, 0
    %v61 = vshrl.u32 %v60, 5
    %v62 = vand.u32 %v60, 31
    %v63 = vsub.s32 32, %v62
    %v64 = vshrl.u32 683565275, %v63
    %v65 = vshll.u32 683565275, %v62
    %v66 = vshrl.u32 2475754826, %v63
    %v67 = vor.u32 %v65, %v66
    %v68 = vshll.u32 2475754826, %v62
    %v69 = vshrl.u32 2131351028, %v63
    %v70 = vor.u32 %v68, %v69
    %v71 = vshll.u32 2131351028, %v62
    %v72 = vshrl.u32 2102212464, %v63
    %v73 = vor.u32 %v71, %v72
    %v74 = vshll.u32 2102212464, %v62
    %v75 = vshrl.u32 920167782, %v63
    %v76 = vor.u32 %v74, %v75
    %v77 = vshll.u32 920167782, %v62
    %v78 = vshrl.u32 1326507024, %v63
    %v79 = vor.u32 %v77, %v78
    %vm80 = vcmp.lt.s32.totalorder %v61, 1
    %vm81 = vcmp.lt.s32.totalorder %v61, 2
    %vm82 = vcmp.lt.s32.totalorder %v61, 3
    %vm83 = vcmp.lt.s32.totalorder %v61, 4
    %v84 = vsel %vm80, %v64, %v67
    %v85 = vsel %vm83, %v73, 2102212464
    %v86 = vsel %vm82, %v70, %v85
    %v87 = vsel %vm81, %v84, %v86
    %v88 = vsel %vm80, %v67, %v70
    %v89 = vsel %vm83, %v76, 920167782
    %v90 = vsel %vm82, %v73, %v89
    %v91 = vsel %vm81, %v88, %v90
    %v92 = vsel %vm80, %v70, %v73
    %v93 = vsel %vm83, %v79, 1326507024
    %v94 = vsel %vm82, %v76, %v93
    %v95 = vsel %vm81, %v92, %v94
    %v96 = vshll.u32 %v56, 8
    %v97 = vmul.u32.u64.compose %v96, %v95
    %v98 = vextract.low.u32 %v97
    %v99 = vextract.high.u32 %v97
    %v100 = vmul.u32.u64.compose %v96, %v91
    %v101 = vextract.low.u32 %v100
    %v102 = vextract.high.u32 %v100
    %v103 = vmul.u32 %v96, %v87
    %v104 = vadd.s32 %v99, %v101
    %vm105 = vc.u32 %v99, %v101
    %v106 = vadd.s32 %v102, 1
    %v107 = vsel %vm105, %v106, %v102
    %v108 = vadd.s32 %v103, %v107
    %v109 = vadd.s32 %v108, 536870912
    %v110 = vshrl.u32 %v109, 30
    %v111 = vshll.u32 %v110, 30
    %v112 = vsub.s32 %v108, %v111
    %vm113 = vcmp.lt.s32.totalorder %v112, 0
    %v114 = vsub.s32 0, %v112
    %v115 = vsel %vm113, %v114, %v112
    %v116 = vclz %v115
    %v117 = vsub.s32 %v116, 2
    %vm118 = vcmp.gt.s32.totalorder 0, %v117
    %v119 = vsel %vm118, 0, %v117
    %v120 = vsub.s32 32, %v119
    %v121 = vshll.u32 %v112, %v119
    %v122 = vshrl.u32 %v104, %v120
    %v123 = vor.u32 %v121, %v122
    %v124 = vsub.s32 4294967266, %v119
    %v125 = vadd.s32 %v124, 127
    %v126 = vshll.u32 %v125, 23
    %v127 = vor.u32 4788187, %v126
    %v128 = vand.u32 2147483647, %v127
    %v130 = vcvt.s32.f32 %v123
    %v131 = vmul.f32 %v130, %v128
    %v132 = vxor.u32 %v131, 2147483648
    %v133 = vsel %vm50, %v132, %v131
    %v134 = vsub.s32 4, %v110
    %v135 = vsel %vm50, %v134, %v110
    %v136 = vsel %vm49, %v47, %v133
    %v137 = vsel %vm49, 0, %v135
    %v138 = vcosq.f32.pop %v136
    %v139 = vsinq.f32.pop %v136
    %vm140 = vweird.f32 %v47
    %v141 = vadd.s32 %v137, 3
    %v142 = vand.u32 %v141, 3
    %vm143 = vcmp.lt.s32.totalorder %v142, 2
    %vm144 = vcmp.eq.s32.totalorder %v142, 0
    %v145 = vxor.u32 %v139, 2147483648
    %v146 = vsel %vm144, %v138, %v145
    %vm147 = vcmp.eq.s32.totalorder %v142, 2
    %v148 = vxor.u32 %v138, 2147483648
    %v149 = vsel %vm147, %v148, %v139
    %v150 = vsel %vm143, %v146, %v149
    %v151 = vsel %vm140, nan, %v150
    %v152 = vld [vmem:[%s3] sm:$0xf]
    %v154 = vlaneseq
    %v155 = vshrl.u32 %v154, 7
    %v156 = vsub.s32 0, %v155
    %v157 = vrot.slane %v151, %v156
    %v158 = vlaneseq
    %v159 = vshrl.u32 %v158, 7
    %v160 = vsub.s32 1, %v159
    %v161 = vrot.slane %v151, %v160
    %v162 = vcombine.low %v157, %v161
    %v164 = vunpack.c.l.s4 1983009808
    %v165 = vunpack.c.0.s8 %v164
    %v166 = vlaneseq
    %v167 = vshrl.u32 %v166, 7
    %v168 = vsub.s32 %v165, %v167
    %v169 = vrot.slane %v162, %v168
    %v171 = vadd.f32 %v152, %v169
    %172 = vst [vmem:[#allocation9] sm:$0xf] %v171
    // Predicated region
    $region22: #{tpu_custom_call.1} parent=1 // pred_check
      _
    $region23: #{tpu_custom_call.1} parent=1 // pred_check_branch
      %174 = sbr.rel (0) target = $region25
    $region24: #{tpu_custom_call.1} parent=1 // pred_region
      %s176 = ssub.s32 64, 64
      %177 = vsyncadd [#allocation6], %s176
      %s179 = sshll.u32 [#allocation9], 4
      %s180 = int_to_ptr.vmem [resolvable:$true] %s179
      %182 = dma.vmem_to_hbm [thread:$0]  %s180, 64, %s4, [#allocation6]
    $region25: #{tpu_custom_call.1} parent=1 // pred_fallthru
      _
    // Predicated region
    $region26: #{tpu_custom_call.1} parent=1 // pred_check
      _
    $region27: #{tpu_custom_call.1} parent=1 // pred_check_branch
      %184 = sbr.rel (0) target = $region29
    $region28: #{tpu_custom_call.1} parent=1 // pred_region
      %185 = dma.done [#allocation6], 64
    $region29: #{tpu_custom_call.1} parent=1 // pred_fallthru
      _
    %186 = vsyncpa [#allocation5], 1
    %187 = vsyncpa [#allocation8], 1
    %188 = vsyncpa [#allocation6], 1

</llo_original>
